<compile_context>
chip_gen: v5e
topology: v5e:2x2
jax: 0.10.0
libtpu: 0.0.40
codegen_flags: <defaults>
</compile_context>

<pallas_src>
import functools

import jax
import jax.numpy as jnp
from jax.experimental import pallas as pl
from jax.experimental.pallas import tpu as pltpu


def _round_up(n, m):
    return ((n + m - 1) // m) * m


def _cdiv(a, b):
    return -(-a // b)


def _glu_kernel(x_ref, w4_ref, w5_ref, b4_ref, b5_ref, o_ref, *, approx_sigmoid):
    # bf16 cast done in-kernel (free VPU work under an MXU/DMA-bound loop);
    # MXU accumulates in f32.
    x_bf = x_ref[...].astype(jnp.bfloat16)
    gate = jnp.dot(x_bf, w4_ref[...], preferred_element_type=jnp.float32) + b4_ref[...]
    lin = jnp.dot(x_bf, w5_ref[...], preferred_element_type=jnp.float32) + b5_ref[...]
    if approx_sigmoid:
        # sigmoid via exp + EUP approximate reciprocal (keeps VALU slots free).
        sig = pl.reciprocal(1.0 + jnp.exp(-gate), approx=True)
    else:
        sig = jax.nn.sigmoid(gate)
    o_ref[...] = (sig * lin).astype(o_ref.dtype)


def _device_tuning():
    """Per-TPU-generation defaults: (row tile, output-col tile, vmem limit)."""
    kind = ""
    try:
        kind = jax.devices()[0].device_kind.lower()
    except Exception:
        pass
    if "v7" in kind or "7x" in kind:
        # 64 MiB VMEM, 2 TensorCores, 256-tall MXU -> modest tiles, tight limit.
        return 256, 256, 56 * 1024 * 1024
    if "v6" in kind:
        # 128 MiB VMEM, 256-tall MXU -> big row tiles for the HBM roofline.
        return 512, 512, 100 * 1024 * 1024
    if "v5" in kind:
        # 128 MiB VMEM, lowest HBM BW -> big tiles amortize per-step overhead.
        return 512, 512, 100 * 1024 * 1024
    return 256, 256, 48 * 1024 * 1024


def prepare_glu_params(w4, b4, w5, b5):
    """Pad + cast the GLU weights ONCE (hoisted out of the per-call path).

    w4/w5: (input_size, hidden) -- transposed torch Linear weights.
    b4/b5: (hidden,).
    """
    f, h = w4.shape
    f_pad = _round_up(f, 128)
    h_pad = _round_up(h, 128)

    def pad_w(w):
        return jnp.pad(w.astype(jnp.bfloat16), ((0, f_pad - f), (0, h_pad - h)))

    def pad_b(b):
        return jnp.pad(b.astype(jnp.float32).reshape(1, -1), ((0, 0), (0, h_pad - h)))

    return {
        "w4": pad_w(w4), "w5": pad_w(w5),
        "b4": pad_b(b4), "b5": pad_b(b5),
        "input_size": f, "hidden_size": h,
    }


def gated_linear_unit(x, params, *, block_rows=None, block_cols=None,
                      vmem_limit_bytes=None, out_dtype=jnp.float32,
                      approx_sigmoid=True):
    """Eval-mode GatedLinearUnit forward: sigmoid(x@W4 + b4) * (x@W5 + b5).

    `params` comes from prepare_glu_params().  `approx_sigmoid=True` uses the
    EUP approximate reciprocal (inference-grade accuracy); pass False for an
    exact sigmoid.
    """
    f = params["input_size"]
    h = params["hidden_size"]
    f_pad, h_pad = params["w4"].shape

    d_rows, d_cols, d_vmem = _device_tuning()
    block_rows = d_rows if block_rows is None else block_rows
    block_cols = d_cols if block_cols is None else block_cols
    vmem_limit_bytes = d_vmem if vmem_limit_bytes is None else vmem_limit_bytes

    orig_lead = x.shape[:-1]
    x2 = x.reshape(-1, f).astype(jnp.float32)
    r = x2.shape[0]

    # Only the feature (K) dim needs a zero pad (matmul correctness); the row
    # dim is handled by a non-divisible grid with a masked partial last block.
    xp = jnp.pad(x2, ((0, 0), (0, f_pad - f))) if f_pad != f else x2

    # Row tile: multiple of 8 (16 if the output dtype is sub-32-bit), split
    # into >= 2 row blocks so both v7x TensorCores get work.
    row_align = 16 if jnp.dtype(out_dtype).itemsize < 4 else 8
    tb = min(block_rows, _round_up(max(r, row_align), row_align))
    n_row = _cdiv(r, tb)
    if n_row < 2 and r > row_align:
        tb = _round_up(_cdiv(r, 2), row_align)
        n_row = _cdiv(r, tb)

    # Output-width (N) tile: bounds the live (TB, 2*TN) accumulator and the
    # VMEM-resident weight slice for large hidden sizes.
    tn = min(block_cols, h_pad)
    n_col = _cdiv(h_pad, tn)

    rows_eff = n_row * tb
    cols_eff = n_col * tn
    flops = 2 * 2 * rows_eff * f_pad * cols_eff            # two matmuls
    transcendentals = rows_eff * cols_eff                  # exp in sigmoid
    bytes_accessed = (r * f_pad * 4 + 2 * f_pad * h_pad * 2 + 2 * h_pad * 4
                      + r * h_pad * jnp.dtype(out_dtype).itemsize)

    # Weight / bias blocks are grid-constant when there is a single N block;
    # single-buffer them (double-buffering buys nothing, halves VMEM).
    single_buffer_weights = n_col == 1

    def _w_spec(shape, index_map, single_buffer):
        if single_buffer:
            return pl.BlockSpec(shape, index_map, pipeline_mode=pl.Buffered(1))
        return pl.BlockSpec(shape, index_map)

    def _build(single_buffer):
        in_specs = [
            pl.BlockSpec((tb, f_pad), lambda i, j: (i, 0)),             # x rows
            _w_spec((f_pad, tn), lambda i, j: (0, j), single_buffer),   # W4 cols
            _w_spec((f_pad, tn), lambda i, j: (0, j), single_buffer),   # W5 cols
            _w_spec((1, tn), lambda i, j: (0, j), single_buffer),       # b4
            _w_spec((1, tn), lambda i, j: (0, j), single_buffer),       # b5
        ]
        return pl.pallas_call(
            functools.partial(_glu_kernel, approx_sigmoid=approx_sigmoid),
            out_shape=jax.ShapeDtypeStruct((r, h_pad), out_dtype),
            grid=(n_row, n_col),
            in_specs=in_specs,
            out_specs=pl.BlockSpec((tb, tn), lambda i, j: (i, j)),
            compiler_params=pltpu.CompilerParams(
                dimension_semantics=("parallel", "parallel"),
                vmem_limit_bytes=vmem_limit_bytes),
            cost_estimate=pl.CostEstimate(
                flops=flops, transcendentals=transcendentals,
                bytes_accessed=bytes_accessed),
        )

    args = (xp, params["w4"], params["w5"], params["b4"], params["b5"])
    try:
        out = _build(single_buffer_weights)(*args)
    except Exception:
        if not single_buffer_weights:
            raise
        # pl.Buffered(1) unsupported on this jax build -> default pipelining.
        out = _build(False)(*args)

    # TODO(synk): for very large input_size, add an innermost "arbitrary" K
    # grid axis over f_pad with an f32 VMEM scratch accumulator (P3 pattern)
    # instead of keeping the full (f_pad, tn) weight blocks resident.

    return out[:, :h].reshape(*orig_lead, h)


def init_params(key, input_size, hidden_size):
    """Matches the torch init: xavier_uniform_ weights, zero biases.
    Weights stored transposed, i.e. (in_features, out_features)."""
    k4, k5 = jax.random.split(key, 2)

    def xavier(k, fan_in, fan_out):
        limit = (6.0 / (fan_in + fan_out)) ** 0.5
        return jax.random.uniform(k, (fan_in, fan_out), jnp.float32, -limit, limit)

    return {
        "w4": xavier(k4, input_size, hidden_size),
        "b4": jnp.zeros((hidden_size,), jnp.float32),
        "w5": xavier(k5, input_size, hidden_size),
        "b5": jnp.zeros((hidden_size,), jnp.float32),
    }


if __name__ == "__main__":
    # Small deterministic shapes: batch=2, seq=8, input_size=64, hidden=32.
    B, S, F_IN, HIDDEN = 2, 8, 64, 32

    key = jax.random.PRNGKey(0)
    k_x, k_p = jax.random.split(key)
    x = jax.random.normal(k_x, (B, S, F_IN), jnp.float32)
    raw = init_params(k_p, F_IN, HIDDEN)

    # Weight padding / bf16 cast done once, outside the per-call path.
    params = prepare_glu_params(raw["w4"], raw["b4"], raw["w5"], raw["b5"])

    out = gated_linear_unit(x, params)
    jax.block_until_ready(out)

    # Pure-JAX reference (eval mode: dropout identity, activation=None).
    ref = jax.nn.sigmoid(x @ raw["w4"] + raw["b4"]) * (x @ raw["w5"] + raw["b5"])

    assert out.shape == (B, S, HIDDEN)
    assert bool(jnp.all(jnp.isfinite(out)))
    max_err = float(jnp.max(jnp.abs(out - ref)))
    assert max_err < 5e-2, f"max abs error too large: {max_err}"
    print("KERNEL_OK")
</pallas_src>

<mosaic_0001>
module attributes {stable_mosaic.version = 11 : i64} {
  func.func @_glu_kernel(%arg0: i32, %arg1: i32, %arg2: memref<8x128xf32, #tpu.memory_space<vmem>>, %arg3: memref<128x128xbf16, #tpu.memory_space<vmem>>, %arg4: memref<128x128xbf16, #tpu.memory_space<vmem>>, %arg5: memref<1x128xf32, #tpu.memory_space<vmem>>, %arg6: memref<1x128xf32, #tpu.memory_space<vmem>>, %arg7: memref<8x128xf32, #tpu.memory_space<vmem>>) attributes {dimension_semantics = [#tpu.dimension_semantics<parallel>, #tpu.dimension_semantics<parallel>], iteration_bounds = array<i64: 2, 1>, scalar_prefetch = 0 : i64, scratch_operands = 0 : i64, tpu.core_type = #tpu.core_type<tc>, window_params = [{transform_indices = @transform_0, window_bounds = array<i64: 8, 128>}, {pipeline_mode = #tpu.pipeline_mode<synchronous>, transform_indices = @transform_1, window_bounds = array<i64: 128, 128>}, {pipeline_mode = #tpu.pipeline_mode<synchronous>, transform_indices = @transform_2, window_bounds = array<i64: 128, 128>}, {pipeline_mode = #tpu.pipeline_mode<synchronous>, transform_indices = @transform_3, window_bounds = array<i64: 1, 128>}, {pipeline_mode = #tpu.pipeline_mode<synchronous>, transform_indices = @transform_4, window_bounds = array<i64: 1, 128>}, {transform_indices = @transform_5, window_bounds = array<i64: 8, 128>}]} {
    %c0 = arith.constant 0 : index
    %c0_0 = arith.constant 0 : index
    %0 = vector.load %arg2[%c0, %c0_0] : memref<8x128xf32, #tpu.memory_space<vmem>>, vector<8x128xf32>
    %1 = arith.truncf %0 : vector<8x128xf32> to vector<8x128xbf16>
    %c0_1 = arith.constant 0 : index
    %c0_2 = arith.constant 0 : index
    %2 = vector.load %arg3[%c0_1, %c0_2] : memref<128x128xbf16, #tpu.memory_space<vmem>>, vector<128x128xbf16>
    %cst = arith.constant dense<0.000000e+00> : vector<8x128xf32>
    %3 = tpu.matmul %1, %2, %cst {dimension_numbers = #tpu.dot_dimension_numbers<[1], [0], [0], [1], [0, 0, 1, 1], [], []>} : vector<8x128xbf16>, vector<128x128xbf16>, vector<8x128xf32> -> vector<8x128xf32>
    %c0_3 = arith.constant 0 : index
    %c0_4 = arith.constant 0 : index
    %4 = vector.load %arg5[%c0_3, %c0_4] : memref<1x128xf32, #tpu.memory_space<vmem>>, vector<1x128xf32>
    %5 = vector.broadcast %4 : vector<1x128xf32> to vector<8x128xf32>
    %6 = arith.addf %3, %5 : vector<8x128xf32>
    %c0_5 = arith.constant 0 : index
    %c0_6 = arith.constant 0 : index
    %7 = vector.load %arg4[%c0_5, %c0_6] : memref<128x128xbf16, #tpu.memory_space<vmem>>, vector<128x128xbf16>
    %cst_7 = arith.constant dense<0.000000e+00> : vector<8x128xf32>
    %8 = tpu.matmul %1, %7, %cst_7 {dimension_numbers = #tpu.dot_dimension_numbers<[1], [0], [0], [1], [0, 0, 1, 1], [], []>} : vector<8x128xbf16>, vector<128x128xbf16>, vector<8x128xf32> -> vector<8x128xf32>
    %c0_8 = arith.constant 0 : index
    %c0_9 = arith.constant 0 : index
    %9 = vector.load %arg6[%c0_8, %c0_9] : memref<1x128xf32, #tpu.memory_space<vmem>>, vector<1x128xf32>
    %10 = vector.broadcast %9 : vector<1x128xf32> to vector<8x128xf32>
    %11 = arith.addf %8, %10 : vector<8x128xf32>
    %cst_10 = arith.constant 0.000000e+00 : f32
    %12 = vector.broadcast %cst_10 : f32 to vector<8x128xf32>
    %13 = arith.subf %12, %6 : vector<8x128xf32>
    %14 = math.exp %13 : vector<8x128xf32>
    %cst_11 = arith.constant 1.000000e+00 : f32
    %15 = vector.broadcast %cst_11 : f32 to vector<8x128xf32>
    %16 = arith.addf %15, %14 : vector<8x128xf32>
    %17 = tpu.reciprocal %16 {approx = true} : vector<8x128xf32> -> vector<8x128xf32>
    %18 = arith.mulf %17, %11 : vector<8x128xf32>
    %c0_12 = arith.constant 0 : index
    %c0_13 = arith.constant 0 : index
    %19 = vector.load %arg7[%c0_12, %c0_13] : memref<8x128xf32, #tpu.memory_space<vmem>>, vector<8x128xf32>
    tpu.vector_store %arg7[%c0_12, %c0_13], %18 {strides = array<i32>} : memref<8x128xf32, #tpu.memory_space<vmem>>, vector<8x128xf32>,
    return
  }
  func.func @transform_0(%arg0: i32, %arg1: i32) -> (i32, i32) {
    %c0_i32 = arith.constant 0 : i32
    %c0_i32_0 = arith.constant 0 : i32
    return %arg0, %c0_i32 : i32, i32
  }
  func.func @transform_1(%arg0: i32, %arg1: i32) -> (i32, i32) {
    %c0_i32 = arith.constant 0 : i32
    %c0_i32_0 = arith.constant 0 : i32
    return %c0_i32, %arg1 : i32, i32
  }
  func.func @transform_2(%arg0: i32, %arg1: i32) -> (i32, i32) {
    %c0_i32 = arith.constant 0 : i32
    %c0_i32_0 = arith.constant 0 : i32
    return %c0_i32, %arg1 : i32, i32
  }
  func.func @transform_3(%arg0: i32, %arg1: i32) -> (i32, i32) {
    %c0_i32 = arith.constant 0 : i32
    %c0_i32_0 = arith.constant 0 : i32
    return %c0_i32, %arg1 : i32, i32
  }
  func.func @transform_4(%arg0: i32, %arg1: i32) -> (i32, i32) {
    %c0_i32 = arith.constant 0 : i32
    %c0_i32_0 = arith.constant 0 : i32
    return %c0_i32, %arg1 : i32, i32
  }
  func.func @transform_5(%arg0: i32, %arg1: i32) -> (i32, i32) {
    %c0_i32 = arith.constant 0 : i32
    return %arg0, %arg1 : i32, i32
  }
}

module attributes {stable_mosaic.version = 11 : i64} {
  func.func @_glu_kernel(%arg0: i32, %arg1: i32, %arg2: memref<8x128xf32, #tpu.memory_space<vmem>>, %arg3: memref<128x128xbf16, #tpu.memory_space<vmem>>, %arg4: memref<128x128xbf16, #tpu.memory_space<vmem>>, %arg5: memref<1x128xf32, #tpu.memory_space<vmem>>, %arg6: memref<1x128xf32, #tpu.memory_space<vmem>>, %arg7: memref<8x128xf32, #tpu.memory_space<vmem>>) attributes {dimension_semantics = [#tpu.dimension_semantics<parallel>, #tpu.dimension_semantics<parallel>], iteration_bounds = array<i64: 2, 1>, scalar_prefetch = 0 : i64, scratch_operands = 0 : i64, tpu.core_type = #tpu.core_type<tc>, window_params = [{transform_indices = @transform_0, window_bounds = array<i64: 8, 128>}, {transform_indices = @transform_1, window_bounds = array<i64: 128, 128>}, {transform_indices = @transform_2, window_bounds = array<i64: 128, 128>}, {transform_indices = @transform_3, window_bounds = array<i64: 1, 128>}, {transform_indices = @transform_4, window_bounds = array<i64: 1, 128>}, {transform_indices = @transform_5, window_bounds = array<i64: 8, 128>}]} {
    %c0 = arith.constant 0 : index
    %c0_0 = arith.constant 0 : index
    %0 = vector.load %arg2[%c0, %c0_0] : memref<8x128xf32, #tpu.memory_space<vmem>>, vector<8x128xf32>
    %1 = arith.truncf %0 : vector<8x128xf32> to vector<8x128xbf16>
    %c0_1 = arith.constant 0 : index
    %c0_2 = arith.constant 0 : index
    %2 = vector.load %arg3[%c0_1, %c0_2] : memref<128x128xbf16, #tpu.memory_space<vmem>>, vector<128x128xbf16>
    %cst = arith.constant dense<0.000000e+00> : vector<8x128xf32>
    %3 = tpu.matmul %1, %2, %cst {dimension_numbers = #tpu.dot_dimension_numbers<[1], [0], [0], [1], [0, 0, 1, 1], [], []>} : vector<8x128xbf16>, vector<128x128xbf16>, vector<8x128xf32> -> vector<8x128xf32>
    %c0_3 = arith.constant 0 : index
    %c0_4 = arith.constant 0 : index
    %4 = vector.load %arg5[%c0_3, %c0_4] : memref<1x128xf32, #tpu.memory_space<vmem>>, vector<1x128xf32>
    %5 = vector.broadcast %4 : vector<1x128xf32> to vector<8x128xf32>
    %6 = arith.addf %3, %5 : vector<8x128xf32>
    %c0_5 = arith.constant 0 : index
    %c0_6 = arith.constant 0 : index
    %7 = vector.load %arg4[%c0_5, %c0_6] : memref<128x128xbf16, #tpu.memory_space<vmem>>, vector<128x128xbf16>
    %cst_7 = arith.constant dense<0.000000e+00> : vector<8x128xf32>
    %8 = tpu.matmul %1, %7, %cst_7 {dimension_numbers = #tpu.dot_dimension_numbers<[1], [0], [0], [1], [0, 0, 1, 1], [], []>} : vector<8x128xbf16>, vector<128x128xbf16>, vector<8x128xf32> -> vector<8x128xf32>
    %c0_8 = arith.constant 0 : index
    %c0_9 = arith.constant 0 : index
    %9 = vector.load %arg6[%c0_8, %c0_9] : memref<1x128xf32, #tpu.memory_space<vmem>>, vector<1x128xf32>
    %10 = vector.broadcast %9 : vector<1x128xf32> to vector<8x128xf32>
    %11 = arith.addf %8, %10 : vector<8x128xf32>
    %cst_10 = arith.constant 0.000000e+00 : f32
    %12 = vector.broadcast %cst_10 : f32 to vector<8x128xf32>
    %13 = arith.subf %12, %6 : vector<8x128xf32>
    %14 = math.exp %13 : vector<8x128xf32>
    %cst_11 = arith.constant 1.000000e+00 : f32
    %15 = vector.broadcast %cst_11 : f32 to vector<8x128xf32>
    %16 = arith.addf %15, %14 : vector<8x128xf32>
    %17 = tpu.reciprocal %16 {approx = true} : vector<8x128xf32> -> vector<8x128xf32>
    %18 = arith.mulf %17, %11 : vector<8x128xf32>
    %c0_12 = arith.constant 0 : index
    %c0_13 = arith.constant 0 : index
    %19 = vector.load %arg7[%c0_12, %c0_13] : memref<8x128xf32, #tpu.memory_space<vmem>>, vector<8x128xf32>
    tpu.vector_store %arg7[%c0_12, %c0_13], %18 {strides = array<i32>} : memref<8x128xf32, #tpu.memory_space<vmem>>, vector<8x128xf32>,
    return
  }
  func.func @transform_0(%arg0: i32, %arg1: i32) -> (i32, i32) {
    %c0_i32 = arith.constant 0 : i32
    %c0_i32_0 = arith.constant 0 : i32
    return %arg0, %c0_i32 : i32, i32
  }
  func.func @transform_1(%arg0: i32, %arg1: i32) -> (i32, i32) {
    %c0_i32 = arith.constant 0 : i32
    %c0_i32_0 = arith.constant 0 : i32
    return %c0_i32, %arg1 : i32, i32
  }
  func.func @transform_2(%arg0: i32, %arg1: i32) -> (i32, i32) {
    %c0_i32 = arith.constant 0 : i32
    %c0_i32_0 = arith.constant 0 : i32
    return %c0_i32, %arg1 : i32, i32
  }
  func.func @transform_3(%arg0: i32, %arg1: i32) -> (i32, i32) {
    %c0_i32 = arith.constant 0 : i32
    %c0_i32_0 = arith.constant 0 : i32
    return %c0_i32, %arg1 : i32, i32
  }
  func.func @transform_4(%arg0: i32, %arg1: i32) -> (i32, i32) {
    %c0_i32 = arith.constant 0 : i32
    %c0_i32_0 = arith.constant 0 : i32
    return %c0_i32, %arg1 : i32, i32
  }
  func.func @transform_5(%arg0: i32, %arg1: i32) -> (i32, i32) {
    %c0_i32 = arith.constant 0 : i32
    return %arg0, %arg1 : i32, i32
  }
}

</mosaic_0001>

<llo_original>
// kernel: tpu_custom_call.1
$region0: #{tpu_custom_call.1}
  #allocation0 [shape = 'u32[]', space=smem, size = 0x4, offset = 0x4, fixed_abs, tag = 'smem constant byte address 0x4 - core index']
  #allocation1 [shape = 'u32[72,128]{1,0:T(1,128)}', space=vmem, size = 0x9000, scoped, tag = 'internal scratch']
  %s0 = inlined_call_operand.hbm [shape: f32[16,128], index: 0, kind: input, shape index: {}]
  %s1 = inlined_call_operand.hbm [shape: bf16[128,128], index: 1, kind: input, shape index: {}]
  %s2 = inlined_call_operand.hbm [shape: bf16[128,128], index: 2, kind: input, shape index: {}]
  %s3 = inlined_call_operand.vmem [shape: f32[1,128], index: 3, kind: input, shape index: {}]
  %s4 = inlined_call_operand.vmem [shape: f32[1,128], index: 4, kind: input, shape index: {}]
  %s5 = inlined_call_operand.hbm [shape: f32[16,128], index: 5, kind: output, shape index: {}]
  %s6 = sld [smem:[#allocation0]]
  $region65: #{tpu_custom_call.1} parent=0
    _
  %s8 = ssub.s32 1, %s6
  %s9 = scalar_select 0, %s8, %s6
  $region1: #{tpu_custom_call.1} parent=0
    #allocation2 [shape = 'u8[8192]{0}', space=vmem, size = 0x2000, scoped, tag = 'input window, operand 0']
    #allocation3 [shape = 's32[2]{0}', space=sflag, size = 0x8, scoped, tag = 'scoped memory for tpu_custom_call.1']
    #allocation4 [shape = 's32[2]{0}', space=sflag, size = 0x8, scoped, tag = 'scoped memory for tpu_custom_call.1']
    #allocation5 [shape = 'u8[32768]{0}', space=vmem, size = 0x8000, scoped, tag = 'input window, operand 1, single buffered']
    #allocation6 [shape = 's32[1]{0}', space=sflag, size = 0x4, scoped, tag = 'scoped memory for tpu_custom_call.1']
    #allocation7 [shape = 'u8[32768]{0}', space=vmem, size = 0x8000, scoped, tag = 'input window, operand 2, single buffered']
    #allocation8 [shape = 'u8[8192]{0}', space=vmem, size = 0x2000, scoped, tag = 'output window, operand 0']
    %10 = vsyncpa [#allocation3], 0
    %s11 = scalar_lea.sflag [#allocation3], 1
    %12 = vsyncpa %s11, 0
    %13 = vsyncpa [#allocation6], 0
    %14 = vsyncpa [#allocation4], 0
    %s15 = scalar_lea.sflag [#allocation4], 1
    %16 = vsyncpa %s15, 0
    loop: start=0, step=1, limit=4
    $region2: #{tpu_custom_call.1} parent=1 // loop_pre_header
      _
    $region3: #{tpu_custom_call.1} parent=1 // loop_header
      %s18 = sphi 0, %s22
      %p19 = scmp.ge.s32.totalorder %s18, 4
      %s25 = sphi 0, %s37
      %s26 = sphi 0, %s33
      %s27 = sphi 0, %s25
      %s28 = sphi 0, %s26
      %s29 = sphi 0, %s27
      %s30 = sphi 0, %s28
      %s40 = sphi 0, %s42
      %s43 = sphi 0, %s40
      %s44 = sphi 0, %s43
      %s60 = sphi 0, %s44
      %s66 = sphi 0, %s68
      %s69 = sphi 0, %s66
      %s70 = sphi 0, %s69
      %s86 = sphi 0, %s70
      %s92 = sphi 0, %s94
      %s95 = sphi 0, %s92
      %s96 = sphi 0, %s95
      %s112 = sphi 0, %s96
      %s118 = sphi 0, %s120
      %s121 = sphi 0, %s118
      %s122 = sphi 0, %s121
      %s138 = sphi 0, %s122
      %s144 = sphi 0, %s146
      %s147 = sphi 0, %s144
      %s148 = sphi 0, %s147
      %s164 = sphi 0, %s148
      %s172 = sphi 0, %s174
      %s175 = sphi 0, %s172
      %s176 = sphi 0, %s175
      %s192 = sphi 0, %s176
    $region4: #{tpu_custom_call.1} parent=1 // loop_header_branch
      %21 = sbr.rel (%p19) target = $region8
    $region5: #{tpu_custom_call.1} parent=1 // loop_body
      %s23 = ssub.s32 %s18, 1
      %s24 = ssub.s32 %s18, 2
      %s31 = sadd.s32 1, %s26
      %p32 = scmp.ge.s32.totalorder %s31, 1
      %s33 = scalar_select %p32, 0, %s31
      %s34 = sadd.s32 1, %s25
      %s35 = scalar_select %p32, %s34, %s25
      %p36 = scmp.ge.s32.totalorder %s35, 2
      %s37 = scalar_select %p36, 0, %s35
      %s38 = ssub.s32 %s25, %s37
      %p39 = scmp.eq.s32.totalorder %s38, 0
      %s41 = sadd.s32 %s40, 1
      %s42 = scalar_select %p39, %s40, %s41
      %p45 = pneg %p39
      %p46 = scmp.eq.s32.totalorder %s18, 1
      %p47 = por %p45, %p46
      %p48 = scmp.ne.s32.totalorder %s40, %s43
      %p49 = scmp.eq.s32.totalorder %s18, 0
      %p50 = por %p48, %p49
      %p51 = scmp.ne.s32.totalorder %s40, %s43
      %p52 = scmp.eq.s32.totalorder %s23, 1
      %p53 = por %p51, %p52
      %p54 = scmp.ne.s32.totalorder %s43, %s44
      %p55 = scmp.eq.s32.totalorder %s23, 0
      %p56 = por %p54, %p55
      %p57 = scmp.ne.s32.totalorder %s43, %s44
      %p58 = scmp.eq.s32.totalorder %s24, 1
      %p59 = por %p57, %p58
      %p61 = scmp.ne.s32.totalorder %s44, %s60
      %p62 = scmp.eq.s32.totalorder %s24, 0
      %p63 = por %p61, %p62
      %s64 = ssub.s32 %s26, %s33
      %p65 = scmp.eq.s32.totalorder %s64, 0
      %s67 = sadd.s32 %s66, 1
      %s68 = scalar_select %p65, %s66, %s67
      %p71 = pneg %p65
      %p72 = scmp.eq.s32.totalorder %s18, 1
      %p73 = por %p71, %p72
      %p74 = scmp.ne.s32.totalorder %s66, %s69
      %p75 = scmp.eq.s32.totalorder %s18, 0
      %p76 = por %p74, %p75
      %p77 = scmp.ne.s32.totalorder %s66, %s69
      %p78 = scmp.eq.s32.totalorder %s23, 1
      %p79 = por %p77, %p78
      %p80 = scmp.ne.s32.totalorder %s69, %s70
      %p81 = scmp.eq.s32.totalorder %s23, 0
      %p82 = por %p80, %p81
      %p83 = scmp.ne.s32.totalorder %s69, %s70
      %p84 = scmp.eq.s32.totalorder %s24, 1
      %p85 = por %p83, %p84
      %p87 = scmp.ne.s32.totalorder %s70, %s86
      %p88 = scmp.eq.s32.totalorder %s24, 0
      %p89 = por %p87, %p88
      %s90 = ssub.s32 %s26, %s33
      %p91 = scmp.eq.s32.totalorder %s90, 0
      %s93 = sadd.s32 %s92, 1
      %s94 = scalar_select %p91, %s92, %s93
      %p97 = pneg %p91
      %p98 = scmp.eq.s32.totalorder %s18, 1
      %p99 = por %p97, %p98
      %p100 = scmp.ne.s32.totalorder %s92, %s95
      %p101 = scmp.eq.s32.totalorder %s18, 0
      %p102 = por %p100, %p101
      %p103 = scmp.ne.s32.totalorder %s92, %s95
      %p104 = scmp.eq.s32.totalorder %s23, 1
      %p105 = por %p103, %p104
      %p106 = scmp.ne.s32.totalorder %s95, %s96
      %p107 = scmp.eq.s32.totalorder %s23, 0
      %p108 = por %p106, %p107
      %p109 = scmp.ne.s32.totalorder %s95, %s96
      %p110 = scmp.eq.s32.totalorder %s24, 1
      %p111 = por %p109, %p110
      %p113 = scmp.ne.s32.totalorder %s96, %s112
      %p114 = scmp.eq.s32.totalorder %s24, 0
      %p115 = por %p113, %p114
      %s116 = ssub.s32 %s26, %s33
      %p117 = scmp.eq.s32.totalorder %s116, 0
      %s119 = sadd.s32 %s118, 1
      %s120 = scalar_select %p117, %s118, %s119
      %p123 = pneg %p117
      %p124 = scmp.eq.s32.totalorder %s18, 1
      %p125 = por %p123, %p124
      %p126 = scmp.ne.s32.totalorder %s118, %s121
      %p127 = scmp.eq.s32.totalorder %s18, 0
      %p128 = por %p126, %p127
      %p129 = scmp.ne.s32.totalorder %s118, %s121
      %p130 = scmp.eq.s32.totalorder %s23, 1
      %p131 = por %p129, %p130
      %p132 = scmp.ne.s32.totalorder %s121, %s122
      %p133 = scmp.eq.s32.totalorder %s23, 0
      %p134 = por %p132, %p133
      %p135 = scmp.ne.s32.totalorder %s121, %s122
      %p136 = scmp.eq.s32.totalorder %s24, 1
      %p137 = por %p135, %p136
      %p139 = scmp.ne.s32.totalorder %s122, %s138
      %p140 = scmp.eq.s32.totalorder %s24, 0
      %p141 = por %p139, %p140
      %s142 = ssub.s32 %s26, %s33
      %p143 = scmp.eq.s32.totalorder %s142, 0
      %s145 = sadd.s32 %s144, 1
      %s146 = scalar_select %p143, %s144, %s145
      %p149 = pneg %p143
      %p150 = scmp.eq.s32.totalorder %s18, 1
      %p151 = por %p149, %p150
      %p152 = scmp.ne.s32.totalorder %s144, %s147
      %p153 = scmp.eq.s32.totalorder %s18, 0
      %p154 = por %p152, %p153
      %p155 = scmp.ne.s32.totalorder %s144, %s147
      %p156 = scmp.eq.s32.totalorder %s23, 1
      %p157 = por %p155, %p156
      %p158 = scmp.ne.s32.totalorder %s147, %s148
      %p159 = scmp.eq.s32.totalorder %s23, 0
      %p160 = por %p158, %p159
      %p161 = scmp.ne.s32.totalorder %s147, %s148
      %p162 = scmp.eq.s32.totalorder %s24, 1
      %p163 = por %p161, %p162
      %p165 = scmp.ne.s32.totalorder %s148, %s164
      %p166 = scmp.eq.s32.totalorder %s24, 0
      %p167 = por %p165, %p166
      %s168 = ssub.s32 %s25, %s37
      %s169 = ssub.s32 %s26, %s33
      %s170 = sor.u32 %s168, %s169
      %p171 = scmp.eq.s32.totalorder %s170, 0
      %s173 = sadd.s32 %s172, 1
      %s174 = scalar_select %p171, %s172, %s173
      %p177 = pneg %p171
      %p178 = scmp.eq.s32.totalorder %s18, 1
      %p179 = por %p177, %p178
      %p180 = scmp.ne.s32.totalorder %s172, %s175
      %p181 = scmp.eq.s32.totalorder %s18, 0
      %p182 = por %p180, %p181
      %p183 = scmp.ne.s32.totalorder %s172, %s175
      %p184 = scmp.eq.s32.totalorder %s23, 1
      %p185 = por %p183, %p184
      %p186 = scmp.ne.s32.totalorder %s175, %s176
      %p187 = scmp.eq.s32.totalorder %s23, 0
      %p188 = por %p186, %p187
      %p189 = scmp.ne.s32.totalorder %s175, %s176
      %p190 = scmp.eq.s32.totalorder %s24, 1
      %p191 = por %p189, %p190
      %p193 = scmp.ne.s32.totalorder %s176, %s192
      %p194 = scmp.eq.s32.totalorder %s24, 0
      %p195 = por %p193, %p194
      %p196 = scmp.le.s32.totalorder 1, %s18
      %p197 = scmp.lt.s32.totalorder %s18, 3
      %p198 = pnand %p196, %p197
      %p199 = pneg %p198
      // Predicated region
      $region9: #{tpu_custom_call.1} parent=5 // pred_check
        _
      $region10: #{tpu_custom_call.1} parent=5 // pred_check_branch
        %201 = sbr.rel (%p198) target = $region12
      $region11: #{tpu_custom_call.1} parent=5 // pred_region
        %s202 = ssub.s32 %s18, 1
        // Predicated region
        $region13: #{tpu_custom_call.1} parent=11 // pred_check
          %p203 = pneg %p82
        $region14: #{tpu_custom_call.1} parent=11 // pred_check_branch
          %205 = sbr.rel (%p203) target = $region16
        $region15: #{tpu_custom_call.1} parent=11 // pred_region
          %207 = vsyncadd [#allocation6], 0
          %s208 = smul.addr %s28, 4
          %s209 = scalar_lea.hbm %s1, %s208
          %s210 = sshll.u32 %s209, 4
          %s211 = int_to_ptr.hbm [resolvable:$true] %s210
          %s212 = sshll.u32 [#allocation5], 4
          %s213 = int_to_ptr.vmem [resolvable:$true] %s212
          %218 = dma.hbm_to_vmem [thread:$0]  %s211, 1024, %s213, [#allocation6], 64, 64, 4
        $region16: #{tpu_custom_call.1} parent=11 // pred_fallthru
          _
        // Predicated region
        $region17: #{tpu_custom_call.1} parent=11 // pred_check
          %p219 = pneg %p108
        $region18: #{tpu_custom_call.1} parent=11 // pred_check_branch
          %221 = sbr.rel (%p219) target = $region20
        $region19: #{tpu_custom_call.1} parent=11 // pred_region
          %223 = vsyncadd [#allocation6], 0
          %s224 = smul.addr %s28, 4
          %s225 = scalar_lea.hbm %s2, %s224
          %s226 = sshll.u32 %s225, 4
          %s227 = int_to_ptr.hbm [resolvable:$true] %s226
          %s228 = sshll.u32 [#allocation7], 4
          %s229 = int_to_ptr.vmem [resolvable:$true] %s228
          %234 = dma.hbm_to_vmem [thread:$0]  %s227, 1024, %s229, [#allocation6], 64, 64, 4
        $region20: #{tpu_custom_call.1} parent=11 // pred_fallthru
          _
        // Predicated region
        $region21: #{tpu_custom_call.1} parent=11 // pred_check
          %p235 = pneg %p134
        $region22: #{tpu_custom_call.1} parent=11 // pred_check_branch
          %237 = sbr.rel (%p235) target = $region24
        $region23: #{tpu_custom_call.1} parent=11 // pred_region
          %p238 = scmp.lt.s32.totalorder %s28, 0
          %s239 = scalar_select %p238, %s28, 0
          %s240 = scalar_lea.vmem %s3, %s239
        $region24: #{tpu_custom_call.1} parent=11 // pred_fallthru
          _
        // Predicated region
        $region25: #{tpu_custom_call.1} parent=11 // pred_check
          %p241 = pneg %p160
        $region26: #{tpu_custom_call.1} parent=11 // pred_check_branch
          %243 = sbr.rel (%p241) target = $region28
        $region27: #{tpu_custom_call.1} parent=11 // pred_region
          %p244 = scmp.lt.s32.totalorder %s28, 0
          %s245 = scalar_select %p244, %s28, 0
          %s246 = scalar_lea.vmem %s4, %s245
        $region28: #{tpu_custom_call.1} parent=11 // pred_fallthru
          _
      $region12: #{tpu_custom_call.1} parent=5 // pred_fallthru
        _
      %p247 = scmp.lt.s32.totalorder %s18, 2
      // Predicated region
      $region29: #{tpu_custom_call.1} parent=5 // pred_check
        %p248 = pneg %p247
      $region30: #{tpu_custom_call.1} parent=5 // pred_check_branch
        %250 = sbr.rel (%p248) target = $region32
      $region31: #{tpu_custom_call.1} parent=5 // pred_region
        // Predicated region
        $region33: #{tpu_custom_call.1} parent=31 // pred_check
          %p251 = pneg %p50
        $region34: #{tpu_custom_call.1} parent=31 // pred_check_branch
          %253 = sbr.rel (%p251) target = $region36
        $region35: #{tpu_custom_call.1} parent=31 // pred_region
          %s254 = sand.u32 %s40, 1
          %s255 = scalar_lea.sflag [#allocation3], %s254
          %s256 = sand.u32 %s40, 1
          %s257 = smul.addr %s256, 8
          %s258 = scalar_lea.vmem [#allocation2], %s257
          %260 = vsyncadd %s255, 0
          %s261 = smul.addr %s25, 8
          %s262 = scalar_lea.hbm %s0, %s261
          %s264 = sshll.u32 %s262, 4
          %s265 = int_to_ptr.hbm [resolvable:$true] %s264
          %s266 = sshll.u32 %s258, 4
          %s267 = int_to_ptr.vmem [resolvable:$true] %s266
          %269 = dma.hbm_to_vmem [thread:$0]  %s265, 128, %s267, %s255
        $region36: #{tpu_custom_call.1} parent=31 // pred_fallthru
          _
      $region32: #{tpu_custom_call.1} parent=5 // pred_fallthru
        _
      %p270 = scmp.le.s32.totalorder 1, %s18
      %p271 = scmp.lt.s32.totalorder %s18, 3
      %p272 = pnand %p270, %p271
      %p273 = pneg %p272
      // Predicated region
      $region37: #{tpu_custom_call.1} parent=5 // pred_check
        _
      $region38: #{tpu_custom_call.1} parent=5 // pred_check_branch
        %275 = sbr.rel (%p272) target = $region40
      $region39: #{tpu_custom_call.1} parent=5 // pred_region
        %s276 = ssub.s32 %s18, 1
        %s277 = sand.u32 %s43, 1
        %s278 = scalar_lea.sflag [#allocation3], %s277
        %s279 = sand.u32 %s43, 1
        %s280 = smul.addr %s279, 8
        %s281 = scalar_lea.vmem [#allocation2], %s280
        // Predicated region
        $region41: #{tpu_custom_call.1} parent=39 // pred_check
          %p282 = pneg %p56
        $region42: #{tpu_custom_call.1} parent=39 // pred_check_branch
          %284 = sbr.rel (%p282) target = $region44
        $region43: #{tpu_custom_call.1} parent=39 // pred_region
          %286 = dma.done %s278, 128
        $region44: #{tpu_custom_call.1} parent=39 // pred_fallthru
          _
        // Predicated region
        $region45: #{tpu_custom_call.1} parent=39 // pred_check
          %p287 = pneg %p82
        $region46: #{tpu_custom_call.1} parent=39 // pred_check_branch
          %289 = sbr.rel (%p287) target = $region48
        $region47: #{tpu_custom_call.1} parent=39 // pred_region
          %291 = dma.done [#allocation6], 1024
        $region48: #{tpu_custom_call.1} parent=39 // pred_fallthru
          _
        // Predicated region
        $region49: #{tpu_custom_call.1} parent=39 // pred_check
          %p292 = pneg %p108
        $region50: #{tpu_custom_call.1} parent=39 // pred_check_branch
          %294 = sbr.rel (%p292) target = $region52
        $region51: #{tpu_custom_call.1} parent=39 // pred_region
          %296 = dma.done [#allocation6], 1024
        $region52: #{tpu_custom_call.1} parent=39 // pred_fallthru
          _
        %s297 = sand.u32 %s43, 1
        %s298 = scalar_lea.sflag [#allocation3], %s297
        %s299 = sand.u32 %s43, 1
        %s300 = smul.addr %s299, 8
        %s301 = scalar_lea.vmem [#allocation2], %s300
        %p302 = pneg %p56
        %p303 = pneg %p53
        %p304 = pneg %p82
        %p305 = pneg %p79
        %p306 = pneg %p108
        %p307 = pneg %p105
        %p308 = scmp.lt.s32.totalorder %s28, 0
        %s309 = scalar_select %p308, %s28, 0
        %s310 = scalar_lea.vmem %s3, %s309
        %p311 = pneg %p134
        %p312 = pneg %p131
        %p313 = scmp.lt.s32.totalorder %s28, 0
        %s314 = scalar_select %p313, %s28, 0
        %s315 = scalar_lea.vmem %s4, %s314
        %p316 = pneg %p160
        %p317 = pneg %p157
        %p318 = pneg %p188
        %p319 = pneg %p185
        %s320 = sand.u32 %s175, 1
        %s321 = scalar_lea.sflag [#allocation4], %s320
        %s322 = sand.u32 %s175, 1
        %s323 = smul.addr %s322, 8
        %s324 = scalar_lea.vmem [#allocation8], %s323
        %p325 = scmp.lt.s32.totalorder %s28, 0
        %s326 = scalar_select %p325, %s28, 0
        %s327 = scalar_lea.vmem %s3, %s326
        %p328 = scmp.lt.s32.totalorder %s28, 0
        %s329 = scalar_select %p328, %s28, 0
        %s330 = scalar_lea.vmem %s4, %s329
        %v331 = vld [vmem:[%s281] sm:$0xff]
        %v332 = vpack.c.bf16 %v331, %v331
        %v333 = vld [vmem:[#allocation5] sm:$0xf]
        %v334 = vld [vmem:[#allocation5 + $0x4] sm:$0xf]
        %v335 = vld [vmem:[#allocation5 + $0x8] sm:$0xf]
        %v336 = vld [vmem:[#allocation5 + $0xc] sm:$0xf]
        %v337 = vld [vmem:[#allocation5 + $0x10] sm:$0xf]
        %v338 = vld [vmem:[#allocation5 + $0x14] sm:$0xf]
        %v339 = vld [vmem:[#allocation5 + $0x18] sm:$0xf]
        %v340 = vld [vmem:[#allocation5 + $0x1c] sm:$0xf]
        %v341 = vld [vmem:[#allocation5 + $0x20] sm:$0xf]
        %v342 = vld [vmem:[#allocation5 + $0x24] sm:$0xf]
        %v343 = vld [vmem:[#allocation5 + $0x28] sm:$0xf]
        %v344 = vld [vmem:[#allocation5 + $0x2c] sm:$0xf]
        %v345 = vld [vmem:[#allocation5 + $0x30] sm:$0xf]
        %v346 = vld [vmem:[#allocation5 + $0x34] sm:$0xf]
        %v347 = vld [vmem:[#allocation5 + $0x38] sm:$0xf]
        %v348 = vld [vmem:[#allocation5 + $0x3c] sm:$0xf]
        %v349 = vld [vmem:[%s327] sm:$0x1]
        %v351 = vperm.slane %v349, 0
        %v369 = vunpack.c.l.b16 %v333
        %v370 = vunpack.c.l.b16 %v334
        %v371 = vunpack.c.l.b16 %v335
        %v372 = vunpack.c.l.b16 %v336
        %v373 = vunpack.c.l.b16 %v337
        %v374 = vunpack.c.l.b16 %v338
        %v375 = vunpack.c.l.b16 %v339
        %v376 = vunpack.c.l.b16 %v340
        %v377 = vunpack.c.l.b16 %v341
        %v378 = vunpack.c.l.b16 %v342
        %v379 = vunpack.c.l.b16 %v343
        %v380 = vunpack.c.l.b16 %v344
        %v381 = vunpack.c.l.b16 %v345
        %v382 = vunpack.c.l.b16 %v346
        %v383 = vunpack.c.l.b16 %v347
        %v384 = vunpack.c.l.b16 %v348
        %v385 = vpack.c.b16 %v370, %v369
        %v386 = vpack.c.b16 %v372, %v371
        %v387 = vpack.c.b16 %v374, %v373
        %v388 = vpack.c.b16 %v376, %v375
        %v389 = vpack.c.b16 %v378, %v377
        %v390 = vpack.c.b16 %v380, %v379
        %v391 = vpack.c.b16 %v382, %v381
        %v392 = vpack.c.b16 %v384, %v383
        %401 = vmatpush.bf16.msra.mxu0 %v392
        %402 = vmatpush.bf16.msra.mxu0 %v391
        %403 = vmatpush.bf16.msra.mxu0 %v390
        %404 = vmatpush.bf16.msra.mxu0 %v389
        %405 = vmatpush.bf16.msra.mxu0 %v388
        %406 = vmatpush.bf16.msra.mxu0 %v387
        %407 = vmatpush.bf16.msra.mxu0 %v386
        %408 = vmatpush.bf16.msra.mxu0 %v385
        %409 = vmatmul.bf16.gmra.mxu0 %v332
        %v410 = vpop.f32.mrf.mxu0
        %v411 = vadd.f32 %v351, %v410
        %v412 = vpop.f32.mrf.mxu0
        %413 = vdwg.mxu0
        %v414 = vld [vmem:[#allocation7] sm:$0xf]
        %v415 = vld [vmem:[#allocation7 + $0x4] sm:$0xf]
        %v416 = vld [vmem:[#allocation7 + $0x8] sm:$0xf]
        %v417 = vld [vmem:[#allocation7 + $0xc] sm:$0xf]
        %v418 = vld [vmem:[#allocation7 + $0x10] sm:$0xf]
        %v419 = vld [vmem:[#allocation7 + $0x14] sm:$0xf]
        %v420 = vld [vmem:[#allocation7 + $0x18] sm:$0xf]
        %v421 = vld [vmem:[#allocation7 + $0x1c] sm:$0xf]
        %v422 = vld [vmem:[#allocation7 + $0x20] sm:$0xf]
        %v423 = vld [vmem:[#allocation7 + $0x24] sm:$0xf]
        %v424 = vld [vmem:[#allocation7 + $0x28] sm:$0xf]
        %v425 = vld [vmem:[#allocation7 + $0x2c] sm:$0xf]
        %v426 = vld [vmem:[#allocation7 + $0x30] sm:$0xf]
        %v427 = vld [vmem:[#allocation7 + $0x34] sm:$0xf]
        %v428 = vld [vmem:[#allocation7 + $0x38] sm:$0xf]
        %v429 = vld [vmem:[#allocation7 + $0x3c] sm:$0xf]
        %v430 = vld [vmem:[%s330] sm:$0x1]
        %v432 = vperm.slane %v430, 0
        %v450 = vunpack.c.l.b16 %v414
        %v451 = vunpack.c.l.b16 %v415
        %v452 = vunpack.c.l.b16 %v416
        %v453 = vunpack.c.l.b16 %v417
        %v454 = vunpack.c.l.b16 %v418
        %v455 = vunpack.c.l.b16 %v419
        %v456 = vunpack.c.l.b16 %v420
        %v457 = vunpack.c.l.b16 %v421
        %v458 = vunpack.c.l.b16 %v422
        %v459 = vunpack.c.l.b16 %v423
        %v460 = vunpack.c.l.b16 %v424
        %v461 = vunpack.c.l.b16 %v425
        %v462 = vunpack.c.l.b16 %v426
        %v463 = vunpack.c.l.b16 %v427
        %v464 = vunpack.c.l.b16 %v428
        %v465 = vunpack.c.l.b16 %v429
        %v466 = vpack.c.b16 %v451, %v450
        %v467 = vpack.c.b16 %v453, %v452
        %v468 = vpack.c.b16 %v455, %v454
        %v469 = vpack.c.b16 %v457, %v456
        %v470 = vpack.c.b16 %v459, %v458
        %v471 = vpack.c.b16 %v461, %v460
        %v472 = vpack.c.b16 %v463, %v462
        %v473 = vpack.c.b16 %v465, %v464
        %482 = vmatpush.bf16.msra.mxu0 %v473
        %483 = vmatpush.bf16.msra.mxu0 %v472
        %484 = vmatpush.bf16.msra.mxu0 %v471
        %485 = vmatpush.bf16.msra.mxu0 %v470
        %486 = vmatpush.bf16.msra.mxu0 %v469
        %487 = vmatpush.bf16.msra.mxu0 %v468
        %488 = vmatpush.bf16.msra.mxu0 %v467
        %489 = vmatpush.bf16.msra.mxu0 %v466
        %490 = vmatmul.bf16.gmra.mxu0 %v332
        %v491 = vpop.f32.mrf.mxu0
        %v492 = vadd.f32 %v432, %v491
        %v493 = vpop.f32.mrf.mxu0
        %494 = vdwg.mxu0
        %v495 = vsub.f32 0.0, %v411
        %v496 = vmul.f32 %v495, 1.442695
        %v497 = vpow.pop %v496
        %v498 = vadd.f32 %v497, 1.0
        %v499 = vrcp.pop %v498
        %v500 = vmul.f32 %v499, %v492
        %501 = vst [vmem:[%s324] sm:$0xff] %v500
        %s502 = sand.u32 %s175, 1
        %s503 = scalar_lea.sflag [#allocation4], %s502
        %s504 = sand.u32 %s175, 1
        %s505 = smul.addr %s504, 8
        %s506 = scalar_lea.vmem [#allocation8], %s505
        // Predicated region
        $region53: #{tpu_custom_call.1} parent=39 // pred_check
          %p507 = pneg %p185
        $region54: #{tpu_custom_call.1} parent=39 // pred_check_branch
          %509 = sbr.rel (%p507) target = $region56
        $region55: #{tpu_custom_call.1} parent=39 // pred_region
          %511 = vsyncadd %s503, 0
          %s512 = sadd.s32 %s28, %s27
          %s513 = smul.addr %s512, 8
          %s514 = scalar_lea.hbm %s5, %s513
          %s516 = sshll.u32 %s506, 4
          %s517 = int_to_ptr.vmem [resolvable:$true] %s516
          %s518 = sshll.u32 %s514, 4
          %s519 = int_to_ptr.hbm [resolvable:$true] %s518
          %521 = dma.vmem_to_hbm [thread:$0]  %s517, 128, %s519, %s503
        $region56: #{tpu_custom_call.1} parent=39 // pred_fallthru
          _
      $region40: #{tpu_custom_call.1} parent=5 // pred_fallthru
        _
      %p522 = scmp.le.s32.totalorder 2, %s18
      // Predicated region
      $region57: #{tpu_custom_call.1} parent=5 // pred_check
        %p523 = pneg %p522
      $region58: #{tpu_custom_call.1} parent=5 // pred_check_branch
        %525 = sbr.rel (%p523) target = $region60
      $region59: #{tpu_custom_call.1} parent=5 // pred_region
        %s526 = ssub.s32 %s18, 2
        // Predicated region
        $region61: #{tpu_custom_call.1} parent=59 // pred_check
          %p527 = pneg %p191
        $region62: #{tpu_custom_call.1} parent=59 // pred_check_branch
          %529 = sbr.rel (%p527) target = $region64
        $region63: #{tpu_custom_call.1} parent=59 // pred_region
          %s530 = sand.u32 %s176, 1
          %s531 = scalar_lea.sflag [#allocation4], %s530
          %s532 = sand.u32 %s176, 1
          %s533 = smul.addr %s532, 8
          %s534 = scalar_lea.vmem [#allocation8], %s533
          %536 = dma.done %s531, 128
        $region64: #{tpu_custom_call.1} parent=59 // pred_fallthru
          _
      $region60: #{tpu_custom_call.1} parent=5 // pred_fallthru
        _
    $region6: #{tpu_custom_call.1} parent=1 // loop_footer
      %s22 = sadd.s32 1, %s18
    $region7: #{tpu_custom_call.1} parent=1 // loop_footer_branch
      %17 = sbr.rel target = $region3
    $region8: #{tpu_custom_call.1} parent=1 // loop_exit
      _
    %537 = vsyncpa [#allocation3], 1
    %s538 = scalar_lea.sflag [#allocation3], 1
    %539 = vsyncpa %s538, 1
    %540 = vsyncpa [#allocation6], 1
    %541 = vsyncpa [#allocation4], 1
    %s542 = scalar_lea.sflag [#allocation4], 1
    %543 = vsyncpa %s542, 1

// kernel: tpu_custom_call.1
$region0: #{tpu_custom_call.1}
  #allocation0 [shape = 'u32[]', space=smem, size = 0x4, offset = 0x4, fixed_abs, tag = 'smem constant byte address 0x4 - core index']
  #allocation1 [shape = 'u32[72,128]{1,0:T(1,128)}', space=vmem, size = 0x9000, scoped, tag = 'internal scratch']
  %s0 = inlined_call_operand.hbm [shape: f32[16,128], index: 0, kind: input, shape index: {}]
  %s1 = inlined_call_operand.hbm [shape: bf16[128,128], index: 1, kind: input, shape index: {}]
  %s2 = inlined_call_operand.hbm [shape: bf16[128,128], index: 2, kind: input, shape index: {}]
  %s3 = inlined_call_operand.vmem [shape: f32[1,128], index: 3, kind: input, shape index: {}]
  %s4 = inlined_call_operand.vmem [shape: f32[1,128], index: 4, kind: input, shape index: {}]
  %s5 = inlined_call_operand.hbm [shape: f32[16,128], index: 5, kind: output, shape index: {}]
  %s6 = sld [smem:[#allocation0]]
  $region65: #{tpu_custom_call.1} parent=0
    _
  %s8 = ssub.s32 1, %s6
  %s9 = scalar_select 0, %s8, %s6
  $region1: #{tpu_custom_call.1} parent=0
    #allocation2 [shape = 'u8[8192]{0}', space=vmem, size = 0x2000, scoped, tag = 'input window, operand 0']
    #allocation3 [shape = 's32[2]{0}', space=sflag, size = 0x8, scoped, tag = 'scoped memory for tpu_custom_call.1']
    #allocation4 [shape = 's32[2]{0}', space=sflag, size = 0x8, scoped, tag = 'scoped memory for tpu_custom_call.1']
    #allocation5 [shape = 'u8[32768]{0}', space=vmem, size = 0x8000, scoped, tag = 'input window, operand 1, single buffered']
    #allocation6 [shape = 's32[1]{0}', space=sflag, size = 0x4, scoped, tag = 'scoped memory for tpu_custom_call.1']
    #allocation7 [shape = 'u8[32768]{0}', space=vmem, size = 0x8000, scoped, tag = 'input window, operand 2, single buffered']
    #allocation8 [shape = 'u8[8192]{0}', space=vmem, size = 0x2000, scoped, tag = 'output window, operand 0']
    %10 = vsyncpa [#allocation3], 0
    %s11 = scalar_lea.sflag [#allocation3], 1
    %12 = vsyncpa %s11, 0
    %13 = vsyncpa [#allocation6], 0
    %14 = vsyncpa [#allocation4], 0
    %s15 = scalar_lea.sflag [#allocation4], 1
    %16 = vsyncpa %s15, 0
    loop: start=0, step=1, limit=4
    $region2: #{tpu_custom_call.1} parent=1 // loop_pre_header
      _
    $region3: #{tpu_custom_call.1} parent=1 // loop_header
      %s18 = sphi 0, %s22
      %p19 = scmp.ge.s32.totalorder %s18, 4
      %s25 = sphi 0, %s37
      %s26 = sphi 0, %s33
      %s27 = sphi 0, %s25
      %s28 = sphi 0, %s26
      %s29 = sphi 0, %s27
      %s30 = sphi 0, %s28
      %s40 = sphi 0, %s42
      %s43 = sphi 0, %s40
      %s44 = sphi 0, %s43
      %s60 = sphi 0, %s44
      %s66 = sphi 0, %s68
      %s69 = sphi 0, %s66
      %s70 = sphi 0, %s69
      %s86 = sphi 0, %s70
      %s92 = sphi 0, %s94
      %s95 = sphi 0, %s92
      %s96 = sphi 0, %s95
      %s112 = sphi 0, %s96
      %s118 = sphi 0, %s120
      %s121 = sphi 0, %s118
      %s122 = sphi 0, %s121
      %s138 = sphi 0, %s122
      %s144 = sphi 0, %s146
      %s147 = sphi 0, %s144
      %s148 = sphi 0, %s147
      %s164 = sphi 0, %s148
      %s172 = sphi 0, %s174
      %s175 = sphi 0, %s172
      %s176 = sphi 0, %s175
      %s192 = sphi 0, %s176
    $region4: #{tpu_custom_call.1} parent=1 // loop_header_branch
      %21 = sbr.rel (%p19) target = $region8
    $region5: #{tpu_custom_call.1} parent=1 // loop_body
      %s23 = ssub.s32 %s18, 1
      %s24 = ssub.s32 %s18, 2
      %s31 = sadd.s32 1, %s26
      %p32 = scmp.ge.s32.totalorder %s31, 1
      %s33 = scalar_select %p32, 0, %s31
      %s34 = sadd.s32 1, %s25
      %s35 = scalar_select %p32, %s34, %s25
      %p36 = scmp.ge.s32.totalorder %s35, 2
      %s37 = scalar_select %p36, 0, %s35
      %s38 = ssub.s32 %s25, %s37
      %p39 = scmp.eq.s32.totalorder %s38, 0
      %s41 = sadd.s32 %s40, 1
      %s42 = scalar_select %p39, %s40, %s41
      %p45 = pneg %p39
      %p46 = scmp.eq.s32.totalorder %s18, 1
      %p47 = por %p45, %p46
      %p48 = scmp.ne.s32.totalorder %s40, %s43
      %p49 = scmp.eq.s32.totalorder %s18, 0
      %p50 = por %p48, %p49
      %p51 = scmp.ne.s32.totalorder %s40, %s43
      %p52 = scmp.eq.s32.totalorder %s23, 1
      %p53 = por %p51, %p52
      %p54 = scmp.ne.s32.totalorder %s43, %s44
      %p55 = scmp.eq.s32.totalorder %s23, 0
      %p56 = por %p54, %p55
      %p57 = scmp.ne.s32.totalorder %s43, %s44
      %p58 = scmp.eq.s32.totalorder %s24, 1
      %p59 = por %p57, %p58
      %p61 = scmp.ne.s32.totalorder %s44, %s60
      %p62 = scmp.eq.s32.totalorder %s24, 0
      %p63 = por %p61, %p62
      %s64 = ssub.s32 %s26, %s33
      %p65 = scmp.eq.s32.totalorder %s64, 0
      %s67 = sadd.s32 %s66, 1
      %s68 = scalar_select %p65, %s66, %s67
      %p71 = pneg %p65
      %p72 = scmp.eq.s32.totalorder %s18, 1
      %p73 = por %p71, %p72
      %p74 = scmp.ne.s32.totalorder %s66, %s69
      %p75 = scmp.eq.s32.totalorder %s18, 0
      %p76 = por %p74, %p75
      %p77 = scmp.ne.s32.totalorder %s66, %s69
      %p78 = scmp.eq.s32.totalorder %s23, 1
      %p79 = por %p77, %p78
      %p80 = scmp.ne.s32.totalorder %s69, %s70
      %p81 = scmp.eq.s32.totalorder %s23, 0
      %p82 = por %p80, %p81
      %p83 = scmp.ne.s32.totalorder %s69, %s70
      %p84 = scmp.eq.s32.totalorder %s24, 1
      %p85 = por %p83, %p84
      %p87 = scmp.ne.s32.totalorder %s70, %s86
      %p88 = scmp.eq.s32.totalorder %s24, 0
      %p89 = por %p87, %p88
      %s90 = ssub.s32 %s26, %s33
      %p91 = scmp.eq.s32.totalorder %s90, 0
      %s93 = sadd.s32 %s92, 1
      %s94 = scalar_select %p91, %s92, %s93
      %p97 = pneg %p91
      %p98 = scmp.eq.s32.totalorder %s18, 1
      %p99 = por %p97, %p98
      %p100 = scmp.ne.s32.totalorder %s92, %s95
      %p101 = scmp.eq.s32.totalorder %s18, 0
      %p102 = por %p100, %p101
      %p103 = scmp.ne.s32.totalorder %s92, %s95
      %p104 = scmp.eq.s32.totalorder %s23, 1
      %p105 = por %p103, %p104
      %p106 = scmp.ne.s32.totalorder %s95, %s96
      %p107 = scmp.eq.s32.totalorder %s23, 0
      %p108 = por %p106, %p107
      %p109 = scmp.ne.s32.totalorder %s95, %s96
      %p110 = scmp.eq.s32.totalorder %s24, 1
      %p111 = por %p109, %p110
      %p113 = scmp.ne.s32.totalorder %s96, %s112
      %p114 = scmp.eq.s32.totalorder %s24, 0
      %p115 = por %p113, %p114
      %s116 = ssub.s32 %s26, %s33
      %p117 = scmp.eq.s32.totalorder %s116, 0
      %s119 = sadd.s32 %s118, 1
      %s120 = scalar_select %p117, %s118, %s119
      %p123 = pneg %p117
      %p124 = scmp.eq.s32.totalorder %s18, 1
      %p125 = por %p123, %p124
      %p126 = scmp.ne.s32.totalorder %s118, %s121
      %p127 = scmp.eq.s32.totalorder %s18, 0
      %p128 = por %p126, %p127
      %p129 = scmp.ne.s32.totalorder %s118, %s121
      %p130 = scmp.eq.s32.totalorder %s23, 1
      %p131 = por %p129, %p130
      %p132 = scmp.ne.s32.totalorder %s121, %s122
      %p133 = scmp.eq.s32.totalorder %s23, 0
      %p134 = por %p132, %p133
      %p135 = scmp.ne.s32.totalorder %s121, %s122
      %p136 = scmp.eq.s32.totalorder %s24, 1
      %p137 = por %p135, %p136
      %p139 = scmp.ne.s32.totalorder %s122, %s138
      %p140 = scmp.eq.s32.totalorder %s24, 0
      %p141 = por %p139, %p140
      %s142 = ssub.s32 %s26, %s33
      %p143 = scmp.eq.s32.totalorder %s142, 0
      %s145 = sadd.s32 %s144, 1
      %s146 = scalar_select %p143, %s144, %s145
      %p149 = pneg %p143
      %p150 = scmp.eq.s32.totalorder %s18, 1
      %p151 = por %p149, %p150
      %p152 = scmp.ne.s32.totalorder %s144, %s147
      %p153 = scmp.eq.s32.totalorder %s18, 0
      %p154 = por %p152, %p153
      %p155 = scmp.ne.s32.totalorder %s144, %s147
      %p156 = scmp.eq.s32.totalorder %s23, 1
      %p157 = por %p155, %p156
      %p158 = scmp.ne.s32.totalorder %s147, %s148
      %p159 = scmp.eq.s32.totalorder %s23, 0
      %p160 = por %p158, %p159
      %p161 = scmp.ne.s32.totalorder %s147, %s148
      %p162 = scmp.eq.s32.totalorder %s24, 1
      %p163 = por %p161, %p162
      %p165 = scmp.ne.s32.totalorder %s148, %s164
      %p166 = scmp.eq.s32.totalorder %s24, 0
      %p167 = por %p165, %p166
      %s168 = ssub.s32 %s25, %s37
      %s169 = ssub.s32 %s26, %s33
      %s170 = sor.u32 %s168, %s169
      %p171 = scmp.eq.s32.totalorder %s170, 0
      %s173 = sadd.s32 %s172, 1
      %s174 = scalar_select %p171, %s172, %s173
      %p177 = pneg %p171
      %p178 = scmp.eq.s32.totalorder %s18, 1
      %p179 = por %p177, %p178
      %p180 = scmp.ne.s32.totalorder %s172, %s175
      %p181 = scmp.eq.s32.totalorder %s18, 0
      %p182 = por %p180, %p181
      %p183 = scmp.ne.s32.totalorder %s172, %s175
      %p184 = scmp.eq.s32.totalorder %s23, 1
      %p185 = por %p183, %p184
      %p186 = scmp.ne.s32.totalorder %s175, %s176
      %p187 = scmp.eq.s32.totalorder %s23, 0
      %p188 = por %p186, %p187
      %p189 = scmp.ne.s32.totalorder %s175, %s176
      %p190 = scmp.eq.s32.totalorder %s24, 1
      %p191 = por %p189, %p190
      %p193 = scmp.ne.s32.totalorder %s176, %s192
      %p194 = scmp.eq.s32.totalorder %s24, 0
      %p195 = por %p193, %p194
      %p196 = scmp.le.s32.totalorder 1, %s18
      %p197 = scmp.lt.s32.totalorder %s18, 3
      %p198 = pnand %p196, %p197
      %p199 = pneg %p198
      // Predicated region
      $region9: #{tpu_custom_call.1} parent=5 // pred_check
        _
      $region10: #{tpu_custom_call.1} parent=5 // pred_check_branch
        %201 = sbr.rel (%p198) target = $region12
      $region11: #{tpu_custom_call.1} parent=5 // pred_region
        %s202 = ssub.s32 %s18, 1
        // Predicated region
        $region13: #{tpu_custom_call.1} parent=11 // pred_check
          %p203 = pneg %p82
        $region14: #{tpu_custom_call.1} parent=11 // pred_check_branch
          %205 = sbr.rel (%p203) target = $region16
        $region15: #{tpu_custom_call.1} parent=11 // pred_region
          %207 = vsyncadd [#allocation6], 0
          %s208 = smul.addr %s28, 4
          %s209 = scalar_lea.hbm %s1, %s208
          %s210 = sshll.u32 %s209, 4
          %s211 = int_to_ptr.hbm [resolvable:$true] %s210
          %s212 = sshll.u32 [#allocation5], 4
          %s213 = int_to_ptr.vmem [resolvable:$true] %s212
          %218 = dma.hbm_to_vmem [thread:$0]  %s211, 1024, %s213, [#allocation6], 64, 64, 4
        $region16: #{tpu_custom_call.1} parent=11 // pred_fallthru
          _
        // Predicated region
        $region17: #{tpu_custom_call.1} parent=11 // pred_check
          %p219 = pneg %p108
        $region18: #{tpu_custom_call.1} parent=11 // pred_check_branch
          %221 = sbr.rel (%p219) target = $region20
        $region19: #{tpu_custom_call.1} parent=11 // pred_region
          %223 = vsyncadd [#allocation6], 0
          %s224 = smul.addr %s28, 4
          %s225 = scalar_lea.hbm %s2, %s224
          %s226 = sshll.u32 %s225, 4
          %s227 = int_to_ptr.hbm [resolvable:$true] %s226
          %s228 = sshll.u32 [#allocation7], 4
          %s229 = int_to_ptr.vmem [resolvable:$true] %s228
          %234 = dma.hbm_to_vmem [thread:$0]  %s227, 1024, %s229, [#allocation6], 64, 64, 4
        $region20: #{tpu_custom_call.1} parent=11 // pred_fallthru
          _
        // Predicated region
        $region21: #{tpu_custom_call.1} parent=11 // pred_check
          %p235 = pneg %p134
        $region22: #{tpu_custom_call.1} parent=11 // pred_check_branch
          %237 = sbr.rel (%p235) target = $region24
        $region23: #{tpu_custom_call.1} parent=11 // pred_region
          %p238 = scmp.lt.s32.totalorder %s28, 0
          %s239 = scalar_select %p238, %s28, 0
          %s240 = scalar_lea.vmem %s3, %s239
        $region24: #{tpu_custom_call.1} parent=11 // pred_fallthru
          _
        // Predicated region
        $region25: #{tpu_custom_call.1} parent=11 // pred_check
          %p241 = pneg %p160
        $region26: #{tpu_custom_call.1} parent=11 // pred_check_branch
          %243 = sbr.rel (%p241) target = $region28
        $region27: #{tpu_custom_call.1} parent=11 // pred_region
          %p244 = scmp.lt.s32.totalorder %s28, 0
          %s245 = scalar_select %p244, %s28, 0
          %s246 = scalar_lea.vmem %s4, %s245
        $region28: #{tpu_custom_call.1} parent=11 // pred_fallthru
          _
      $region12: #{tpu_custom_call.1} parent=5 // pred_fallthru
        _
      %p247 = scmp.lt.s32.totalorder %s18, 2
      // Predicated region
      $region29: #{tpu_custom_call.1} parent=5 // pred_check
        %p248 = pneg %p247
      $region30: #{tpu_custom_call.1} parent=5 // pred_check_branch
        %250 = sbr.rel (%p248) target = $region32
      $region31: #{tpu_custom_call.1} parent=5 // pred_region
        // Predicated region
        $region33: #{tpu_custom_call.1} parent=31 // pred_check
          %p251 = pneg %p50
        $region34: #{tpu_custom_call.1} parent=31 // pred_check_branch
          %253 = sbr.rel (%p251) target = $region36
        $region35: #{tpu_custom_call.1} parent=31 // pred_region
          %s254 = sand.u32 %s40, 1
          %s255 = scalar_lea.sflag [#allocation3], %s254
          %s256 = sand.u32 %s40, 1
          %s257 = smul.addr %s256, 8
          %s258 = scalar_lea.vmem [#allocation2], %s257
          %260 = vsyncadd %s255, 0
          %s261 = smul.addr %s25, 8
          %s262 = scalar_lea.hbm %s0, %s261
          %s264 = sshll.u32 %s262, 4
          %s265 = int_to_ptr.hbm [resolvable:$true] %s264
          %s266 = sshll.u32 %s258, 4
          %s267 = int_to_ptr.vmem [resolvable:$true] %s266
          %269 = dma.hbm_to_vmem [thread:$0]  %s265, 128, %s267, %s255
        $region36: #{tpu_custom_call.1} parent=31 // pred_fallthru
          _
      $region32: #{tpu_custom_call.1} parent=5 // pred_fallthru
        _
      %p270 = scmp.le.s32.totalorder 1, %s18
      %p271 = scmp.lt.s32.totalorder %s18, 3
      %p272 = pnand %p270, %p271
      %p273 = pneg %p272
      // Predicated region
      $region37: #{tpu_custom_call.1} parent=5 // pred_check
        _
      $region38: #{tpu_custom_call.1} parent=5 // pred_check_branch
        %275 = sbr.rel (%p272) target = $region40
      $region39: #{tpu_custom_call.1} parent=5 // pred_region
        %s276 = ssub.s32 %s18, 1
        %s277 = sand.u32 %s43, 1
        %s278 = scalar_lea.sflag [#allocation3], %s277
        %s279 = sand.u32 %s43, 1
        %s280 = smul.addr %s279, 8
        %s281 = scalar_lea.vmem [#allocation2], %s280
        // Predicated region
        $region41: #{tpu_custom_call.1} parent=39 // pred_check
          %p282 = pneg %p56
        $region42: #{tpu_custom_call.1} parent=39 // pred_check_branch
          %284 = sbr.rel (%p282) target = $region44
        $region43: #{tpu_custom_call.1} parent=39 // pred_region
          %286 = dma.done %s278, 128
        $region44: #{tpu_custom_call.1} parent=39 // pred_fallthru
          _
        // Predicated region
        $region45: #{tpu_custom_call.1} parent=39 // pred_check
          %p287 = pneg %p82
        $region46: #{tpu_custom_call.1} parent=39 // pred_check_branch
          %289 = sbr.rel (%p287) target = $region48
        $region47: #{tpu_custom_call.1} parent=39 // pred_region
          %291 = dma.done [#allocation6], 1024
        $region48: #{tpu_custom_call.1} parent=39 // pred_fallthru
          _
        // Predicated region
        $region49: #{tpu_custom_call.1} parent=39 // pred_check
          %p292 = pneg %p108
        $region50: #{tpu_custom_call.1} parent=39 // pred_check_branch
          %294 = sbr.rel (%p292) target = $region52
        $region51: #{tpu_custom_call.1} parent=39 // pred_region
          %296 = dma.done [#allocation6], 1024
        $region52: #{tpu_custom_call.1} parent=39 // pred_fallthru
          _
        %s297 = sand.u32 %s43, 1
        %s298 = scalar_lea.sflag [#allocation3], %s297
        %s299 = sand.u32 %s43, 1
        %s300 = smul.addr %s299, 8
        %s301 = scalar_lea.vmem [#allocation2], %s300
        %p302 = pneg %p56
        %p303 = pneg %p53
        %p304 = pneg %p82
        %p305 = pneg %p79
        %p306 = pneg %p108
        %p307 = pneg %p105
        %p308 = scmp.lt.s32.totalorder %s28, 0
        %s309 = scalar_select %p308, %s28, 0
        %s310 = scalar_lea.vmem %s3, %s309
        %p311 = pneg %p134
        %p312 = pneg %p131
        %p313 = scmp.lt.s32.totalorder %s28, 0
        %s314 = scalar_select %p313, %s28, 0
        %s315 = scalar_lea.vmem %s4, %s314
        %p316 = pneg %p160
        %p317 = pneg %p157
        %p318 = pneg %p188
        %p319 = pneg %p185
        %s320 = sand.u32 %s175, 1
        %s321 = scalar_lea.sflag [#allocation4], %s320
        %s322 = sand.u32 %s175, 1
        %s323 = smul.addr %s322, 8
        %s324 = scalar_lea.vmem [#allocation8], %s323
        %p325 = scmp.lt.s32.totalorder %s28, 0
        %s326 = scalar_select %p325, %s28, 0
        %s327 = scalar_lea.vmem %s3, %s326
        %p328 = scmp.lt.s32.totalorder %s28, 0
        %s329 = scalar_select %p328, %s28, 0
        %s330 = scalar_lea.vmem %s4, %s329
        %v331 = vld [vmem:[%s281] sm:$0xff]
        %v332 = vpack.c.bf16 %v331, %v331
        %v333 = vld [vmem:[#allocation5] sm:$0xf]
        %v334 = vld [vmem:[#allocation5 + $0x4] sm:$0xf]
        %v335 = vld [vmem:[#allocation5 + $0x8] sm:$0xf]
        %v336 = vld [vmem:[#allocation5 + $0xc] sm:$0xf]
        %v337 = vld [vmem:[#allocation5 + $0x10] sm:$0xf]
        %v338 = vld [vmem:[#allocation5 + $0x14] sm:$0xf]
        %v339 = vld [vmem:[#allocation5 + $0x18] sm:$0xf]
        %v340 = vld [vmem:[#allocation5 + $0x1c] sm:$0xf]
        %v341 = vld [vmem:[#allocation5 + $0x20] sm:$0xf]
        %v342 = vld [vmem:[#allocation5 + $0x24] sm:$0xf]
        %v343 = vld [vmem:[#allocation5 + $0x28] sm:$0xf]
        %v344 = vld [vmem:[#allocation5 + $0x2c] sm:$0xf]
        %v345 = vld [vmem:[#allocation5 + $0x30] sm:$0xf]
        %v346 = vld [vmem:[#allocation5 + $0x34] sm:$0xf]
        %v347 = vld [vmem:[#allocation5 + $0x38] sm:$0xf]
        %v348 = vld [vmem:[#allocation5 + $0x3c] sm:$0xf]
        %v349 = vld [vmem:[%s327] sm:$0x1]
        %v351 = vperm.slane %v349, 0
        %v369 = vunpack.c.l.b16 %v333
        %v370 = vunpack.c.l.b16 %v334
        %v371 = vunpack.c.l.b16 %v335
        %v372 = vunpack.c.l.b16 %v336
        %v373 = vunpack.c.l.b16 %v337
        %v374 = vunpack.c.l.b16 %v338
        %v375 = vunpack.c.l.b16 %v339
        %v376 = vunpack.c.l.b16 %v340
        %v377 = vunpack.c.l.b16 %v341
        %v378 = vunpack.c.l.b16 %v342
        %v379 = vunpack.c.l.b16 %v343
        %v380 = vunpack.c.l.b16 %v344
        %v381 = vunpack.c.l.b16 %v345
        %v382 = vunpack.c.l.b16 %v346
        %v383 = vunpack.c.l.b16 %v347
        %v384 = vunpack.c.l.b16 %v348
        %v385 = vpack.c.b16 %v370, %v369
        %v386 = vpack.c.b16 %v372, %v371
        %v387 = vpack.c.b16 %v374, %v373
        %v388 = vpack.c.b16 %v376, %v375
        %v389 = vpack.c.b16 %v378, %v377
        %v390 = vpack.c.b16 %v380, %v379
        %v391 = vpack.c.b16 %v382, %v381
        %v392 = vpack.c.b16 %v384, %v383
        %401 = vmatpush.bf16.msra.mxu0 %v392
        %402 = vmatpush.bf16.msra.mxu0 %v391
        %403 = vmatpush.bf16.msra.mxu0 %v390
        %404 = vmatpush.bf16.msra.mxu0 %v389
        %405 = vmatpush.bf16.msra.mxu0 %v388
        %406 = vmatpush.bf16.msra.mxu0 %v387
        %407 = vmatpush.bf16.msra.mxu0 %v386
        %408 = vmatpush.bf16.msra.mxu0 %v385
        %409 = vmatmul.bf16.gmra.mxu0 %v332
        %v410 = vpop.f32.mrf.mxu0
        %v411 = vadd.f32 %v351, %v410
        %v412 = vpop.f32.mrf.mxu0
        %413 = vdwg.mxu0
        %v414 = vld [vmem:[#allocation7] sm:$0xf]
        %v415 = vld [vmem:[#allocation7 + $0x4] sm:$0xf]
        %v416 = vld [vmem:[#allocation7 + $0x8] sm:$0xf]
        %v417 = vld [vmem:[#allocation7 + $0xc] sm:$0xf]
        %v418 = vld [vmem:[#allocation7 + $0x10] sm:$0xf]
        %v419 = vld [vmem:[#allocation7 + $0x14] sm:$0xf]
        %v420 = vld [vmem:[#allocation7 + $0x18] sm:$0xf]
        %v421 = vld [vmem:[#allocation7 + $0x1c] sm:$0xf]
        %v422 = vld [vmem:[#allocation7 + $0x20] sm:$0xf]
        %v423 = vld [vmem:[#allocation7 + $0x24] sm:$0xf]
        %v424 = vld [vmem:[#allocation7 + $0x28] sm:$0xf]
        %v425 = vld [vmem:[#allocation7 + $0x2c] sm:$0xf]
        %v426 = vld [vmem:[#allocation7 + $0x30] sm:$0xf]
        %v427 = vld [vmem:[#allocation7 + $0x34] sm:$0xf]
        %v428 = vld [vmem:[#allocation7 + $0x38] sm:$0xf]
        %v429 = vld [vmem:[#allocation7 + $0x3c] sm:$0xf]
        %v430 = vld [vmem:[%s330] sm:$0x1]
        %v432 = vperm.slane %v430, 0
        %v450 = vunpack.c.l.b16 %v414
        %v451 = vunpack.c.l.b16 %v415
        %v452 = vunpack.c.l.b16 %v416
        %v453 = vunpack.c.l.b16 %v417
        %v454 = vunpack.c.l.b16 %v418
        %v455 = vunpack.c.l.b16 %v419
        %v456 = vunpack.c.l.b16 %v420
        %v457 = vunpack.c.l.b16 %v421
        %v458 = vunpack.c.l.b16 %v422
        %v459 = vunpack.c.l.b16 %v423
        %v460 = vunpack.c.l.b16 %v424
        %v461 = vunpack.c.l.b16 %v425
        %v462 = vunpack.c.l.b16 %v426
        %v463 = vunpack.c.l.b16 %v427
        %v464 = vunpack.c.l.b16 %v428
        %v465 = vunpack.c.l.b16 %v429
        %v466 = vpack.c.b16 %v451, %v450
        %v467 = vpack.c.b16 %v453, %v452
        %v468 = vpack.c.b16 %v455, %v454
        %v469 = vpack.c.b16 %v457, %v456
        %v470 = vpack.c.b16 %v459, %v458
        %v471 = vpack.c.b16 %v461, %v460
        %v472 = vpack.c.b16 %v463, %v462
        %v473 = vpack.c.b16 %v465, %v464
        %482 = vmatpush.bf16.msra.mxu0 %v473
        %483 = vmatpush.bf16.msra.mxu0 %v472
        %484 = vmatpush.bf16.msra.mxu0 %v471
        %485 = vmatpush.bf16.msra.mxu0 %v470
        %486 = vmatpush.bf16.msra.mxu0 %v469
        %487 = vmatpush.bf16.msra.mxu0 %v468
        %488 = vmatpush.bf16.msra.mxu0 %v467
        %489 = vmatpush.bf16.msra.mxu0 %v466
        %490 = vmatmul.bf16.gmra.mxu0 %v332
        %v491 = vpop.f32.mrf.mxu0
        %v492 = vadd.f32 %v432, %v491
        %v493 = vpop.f32.mrf.mxu0
        %494 = vdwg.mxu0
        %v495 = vsub.f32 0.0, %v411
        %v496 = vmul.f32 %v495, 1.442695
        %v497 = vpow.pop %v496
        %v498 = vadd.f32 %v497, 1.0
        %v499 = vrcp.pop %v498
        %v500 = vmul.f32 %v499, %v492
        %501 = vst [vmem:[%s324] sm:$0xff] %v500
        %s502 = sand.u32 %s175, 1
        %s503 = scalar_lea.sflag [#allocation4], %s502
        %s504 = sand.u32 %s175, 1
        %s505 = smul.addr %s504, 8
        %s506 = scalar_lea.vmem [#allocation8], %s505
        // Predicated region
        $region53: #{tpu_custom_call.1} parent=39 // pred_check
          %p507 = pneg %p185
        $region54: #{tpu_custom_call.1} parent=39 // pred_check_branch
          %509 = sbr.rel (%p507) target = $region56
        $region55: #{tpu_custom_call.1} parent=39 // pred_region
          %511 = vsyncadd %s503, 0
          %s512 = sadd.s32 %s28, %s27
          %s513 = smul.addr %s512, 8
          %s514 = scalar_lea.hbm %s5, %s513
          %s516 = sshll.u32 %s506, 4
          %s517 = int_to_ptr.vmem [resolvable:$true] %s516
          %s518 = sshll.u32 %s514, 4
          %s519 = int_to_ptr.hbm [resolvable:$true] %s518
          %521 = dma.vmem_to_hbm [thread:$0]  %s517, 128, %s519, %s503
        $region56: #{tpu_custom_call.1} parent=39 // pred_fallthru
          _
      $region40: #{tpu_custom_call.1} parent=5 // pred_fallthru
        _
      %p522 = scmp.le.s32.totalorder 2, %s18
      // Predicated region
      $region57: #{tpu_custom_call.1} parent=5 // pred_check
        %p523 = pneg %p522
      $region58: #{tpu_custom_call.1} parent=5 // pred_check_branch
        %525 = sbr.rel (%p523) target = $region60
      $region59: #{tpu_custom_call.1} parent=5 // pred_region
        %s526 = ssub.s32 %s18, 2
        // Predicated region
        $region61: #{tpu_custom_call.1} parent=59 // pred_check
          %p527 = pneg %p191
        $region62: #{tpu_custom_call.1} parent=59 // pred_check_branch
          %529 = sbr.rel (%p527) target = $region64
        $region63: #{tpu_custom_call.1} parent=59 // pred_region
          %s530 = sand.u32 %s176, 1
          %s531 = scalar_lea.sflag [#allocation4], %s530
          %s532 = sand.u32 %s176, 1
          %s533 = smul.addr %s532, 8
          %s534 = scalar_lea.vmem [#allocation8], %s533
          %536 = dma.done %s531, 128
        $region64: #{tpu_custom_call.1} parent=59 // pred_fallthru
          _
      $region60: #{tpu_custom_call.1} parent=5 // pred_fallthru
        _
    $region6: #{tpu_custom_call.1} parent=1 // loop_footer
      %s22 = sadd.s32 1, %s18
    $region7: #{tpu_custom_call.1} parent=1 // loop_footer_branch
      %17 = sbr.rel target = $region3
    $region8: #{tpu_custom_call.1} parent=1 // loop_exit
      _
    %537 = vsyncpa [#allocation3], 1
    %s538 = scalar_lea.sflag [#allocation3], 1
    %539 = vsyncpa %s538, 1
    %540 = vsyncpa [#allocation6], 1
    %541 = vsyncpa [#allocation4], 1
    %s542 = scalar_lea.sflag [#allocation4], 1
    %543 = vsyncpa %s542, 1

</llo_original>
